<compile_context>
chip_gen: v7x
topology: tpu7x:2x2x1
jax: 0.10.0
libtpu: 0.0.40
codegen_flags: <defaults>
</compile_context>

<pallas_src>
import functools

import jax
import jax.numpy as jnp
from jax.experimental import pallas as pl
from jax.experimental.pallas import tpu as pltpu


# ---------------------------------------------------------------------------
# Model configuration (mirrors cfgs_model.H1/H2/H3 from get_dqn_cfg_defaults)
# ---------------------------------------------------------------------------
STATE_SIZE = 8      # e.g. LunarLander-style state
ACTION_SIZE = 4
H1 = 64
H2 = 64
H3 = 32


def _round_up(x, m):
    return ((x + m - 1) // m) * m


def _cdiv(a, b):
    return -(-a // b)


def qnetwork_kernel(x_ref,
                    w1_ref, b1_ref,
                    w2_ref, b2_ref,
                    w3_ref, b3_ref,
                    w4_ref, b4_ref,
                    out_ref):
    """x -> relu(x@W1+b1) -> relu(@W2+b2) -> relu(@W3+b3) -> @W4+b4.

    x and all weights are bf16 (MXU fast path); accumulation, bias-add and ReLU
    happen in f32; the output block is [TB, ACTION_SIZE] f32.
    """
    x = x_ref[...]                                                   # bf16

    h = jnp.dot(x, w1_ref[...], preferred_element_type=jnp.float32) + b1_ref[...]
    h = jnp.maximum(h, 0.0).astype(jnp.bfloat16)

    h = jnp.dot(h, w2_ref[...], preferred_element_type=jnp.float32) + b2_ref[...]
    h = jnp.maximum(h, 0.0).astype(jnp.bfloat16)

    h = jnp.dot(h, w3_ref[...], preferred_element_type=jnp.float32) + b3_ref[...]
    h = jnp.maximum(h, 0.0).astype(jnp.bfloat16)

    q = jnp.dot(h, w4_ref[...], preferred_element_type=jnp.float32) + b4_ref[...]
    out_ref[...] = q.astype(out_ref.dtype)


def prepare_params(params):
    """One-time (per parameter update) weight prep: bf16 weights, f32 [1, out] biases."""
    prepared = {}
    for i in range(1, 5):
        prepared[f"w{i}"] = params[f"w{i}"].astype(jnp.bfloat16)
        prepared[f"b{i}"] = params[f"b{i}"].astype(jnp.float32).reshape(1, -1)
    return prepared


def _tile_plan(B, block_b):
    """Balanced batch tiling: TB multiple of 8, >=2 grid steps for B>8 (v7x)."""
    n_tiles = max(_cdiv(B, block_b), 1)
    if n_tiles == 1 and B > 8:
        n_tiles = 2          # let both v7x TensorCores get work
    TB = _round_up(_cdiv(B, n_tiles), 8)
    grid_n = _cdiv(B, TB)
    return TB, grid_n


@functools.partial(jax.jit, static_argnames=("block_b",))
def qnetwork_forward(state, params, *, block_b=4096):
    """Run the QNetwork forward pass via a single batch-gridded pallas_call.

    state:  [B, STATE_SIZE] float32
    params: dict with w1,b1,...,w4,b4 (prepare_params() output preferred;
            raw f32 params also accepted — casts below are trivially folded)
    returns [B, ACTION_SIZE] float32 Q-values.
    """
    B = state.shape[0]
    TB, grid_n = _tile_plan(B, block_b)
    B_pad = TB * grid_n

    x = state.astype(jnp.bfloat16)
    if B_pad != B:
        x = jnp.pad(x, ((0, B_pad - B), (0, 0)))

    w1 = params["w1"].astype(jnp.bfloat16)
    w2 = params["w2"].astype(jnp.bfloat16)
    w3 = params["w3"].astype(jnp.bfloat16)
    w4 = params["w4"].astype(jnp.bfloat16)
    b1 = params["b1"].astype(jnp.float32)
    b2 = params["b2"].astype(jnp.float32)
    b3 = params["b3"].astype(jnp.float32)
    b4 = params["b4"].astype(jnp.float32)

    weights = (w1, b1, w2, b2, w3, b3, w4, b4)

    # x / out are tiled over the batch grid; weights & biases use a constant
    # block index so Pallas keeps them resident in VMEM across grid steps.
    x_spec = pl.BlockSpec((TB, STATE_SIZE), lambda i: (i, 0))
    weight_specs = [pl.BlockSpec(w.shape, lambda i: (0, 0)) for w in weights]
    out_spec = pl.BlockSpec((TB, ACTION_SIZE), lambda i: (i, 0))

    # Scheduling hint for XLA when this call is embedded in a train step.
    flops = 2 * B_pad * (STATE_SIZE * H1 + H1 * H2 + H2 * H3 + H3 * ACTION_SIZE)
    bytes_accessed = (
        x.size * x.dtype.itemsize
        + sum(w.size * w.dtype.itemsize for w in weights)
        + B_pad * ACTION_SIZE * 4
    )

    q_pad = pl.pallas_call(
        qnetwork_kernel,
        out_shape=jax.ShapeDtypeStruct((B_pad, ACTION_SIZE), jnp.float32),
        grid=(grid_n,),
        in_specs=[x_spec] + weight_specs,
        out_specs=out_spec,
        compiler_params=pltpu.CompilerParams(
            dimension_semantics=("parallel",),
            vmem_limit_bytes=32 * 1024 * 1024),
        cost_estimate=pl.CostEstimate(
            flops=flops, transcendentals=0, bytes_accessed=bytes_accessed),
    )(x, *weights)

    # TODO(synk): for the greedy action-selection path, fuse argmax over the
    # ACTION_SIZE columns into the kernel (emit int32 actions, mask pad rows).
    return q_pad[:B] if B_pad != B else q_pad


def init_params(key):
    """Deterministic init mimicking PyTorch Linear default: U(-1/sqrt(fan_in), +)."""
    sizes = [(STATE_SIZE, H1), (H1, H2), (H2, H3), (H3, ACTION_SIZE)]
    params = {}
    for i, (fin, fout) in enumerate(sizes, start=1):
        key, kw, kb = jax.random.split(key, 3)
        bound = 1.0 / jnp.sqrt(jnp.float32(fin))
        params[f"w{i}"] = jax.random.uniform(
            kw, (fin, fout), jnp.float32, minval=-bound, maxval=bound)
        params[f"b{i}"] = jax.random.uniform(
            kb, (1, fout), jnp.float32, minval=-bound, maxval=bound)
    return params


def reference_forward_f32(state, params):
    """Pure-f32 JAX reference."""
    h = jnp.maximum(state @ params["w1"] + params["b1"], 0.0)
    h = jnp.maximum(h @ params["w2"] + params["b2"], 0.0)
    h = jnp.maximum(h @ params["w3"] + params["b3"], 0.0)
    return h @ params["w4"] + params["b4"]


def reference_forward_bf16(state, params):
    """Reference matching the kernel's numerics (bf16 matmul operands, f32 accum)."""
    def mm(a, w):
        return jnp.dot(a.astype(jnp.bfloat16), w.astype(jnp.bfloat16),
                       preferred_element_type=jnp.float32)
    h = jnp.maximum(mm(state, params["w1"]) + params["b1"], 0.0)
    h = jnp.maximum(mm(h, params["w2"]) + params["b2"], 0.0)
    h = jnp.maximum(mm(h, params["w3"]) + params["b3"], 0.0)
    return mm(h, params["w4"]) + params["b4"]


if __name__ == "__main__":
    key = jax.random.PRNGKey(0)
    key, kx = jax.random.split(key)

    B = 8
    state = jax.random.normal(kx, (B, STATE_SIZE), dtype=jnp.float32)
    params = init_params(key)
    prepared = prepare_params(params)

    q_vals = qnetwork_forward(state, prepared)
    jax.block_until_ready(q_vals)

    assert q_vals.shape == (B, ACTION_SIZE)

    q_ref_bf16 = reference_forward_bf16(state, params)
    q_ref_f32 = reference_forward_f32(state, params)
    assert jnp.allclose(q_vals, q_ref_bf16, atol=1e-3, rtol=1e-3)
    assert jnp.allclose(q_vals, q_ref_f32, atol=5e-2, rtol=5e-2)

    # Also exercise a multi-tile grid (ragged batch -> balanced tiles, >=2 steps).
    key, kx2 = jax.random.split(key)
    B2 = 1025
    state2 = jax.random.normal(kx2, (B2, STATE_SIZE), dtype=jnp.float32)
    q2 = qnetwork_forward(state2, prepared)
    jax.block_until_ready(q2)
    assert q2.shape == (B2, ACTION_SIZE)
    assert jnp.allclose(q2, reference_forward_bf16(state2, params), atol=1e-3, rtol=1e-3)

    print("KERNEL_OK")
</pallas_src>

<mosaic_0001>
module attributes {stable_mosaic.version = 11 : i64} {
  func.func @qnetwork_kernel(%arg0: i32, %arg1: memref<8x8xbf16, #tpu.memory_space<vmem>>, %arg2: memref<8x64xbf16, #tpu.memory_space<vmem>>, %arg3: memref<1x64xf32, #tpu.memory_space<vmem>>, %arg4: memref<64x64xbf16, #tpu.memory_space<vmem>>, %arg5: memref<1x64xf32, #tpu.memory_space<vmem>>, %arg6: memref<64x32xbf16, #tpu.memory_space<vmem>>, %arg7: memref<1x32xf32, #tpu.memory_space<vmem>>, %arg8: memref<32x4xbf16, #tpu.memory_space<vmem>>, %arg9: memref<1x4xf32, #tpu.memory_space<vmem>>, %arg10: memref<8x4xf32, #tpu.memory_space<vmem>>) attributes {dimension_semantics = [#tpu.dimension_semantics<parallel>], iteration_bounds = array<i64: 1>, scalar_prefetch = 0 : i64, scratch_operands = 0 : i64, tpu.core_type = #tpu.core_type<tc>, window_params = [{transform_indices = @transform_0, window_bounds = array<i64: 8, 8>}, {pipeline_mode = #tpu.pipeline_mode<synchronous>, transform_indices = @transform_1, window_bounds = array<i64: 8, 64>}, {pipeline_mode = #tpu.pipeline_mode<synchronous>, transform_indices = @transform_2, window_bounds = array<i64: 1, 64>}, {pipeline_mode = #tpu.pipeline_mode<synchronous>, transform_indices = @transform_3, window_bounds = array<i64: 64, 64>}, {pipeline_mode = #tpu.pipeline_mode<synchronous>, transform_indices = @transform_4, window_bounds = array<i64: 1, 64>}, {pipeline_mode = #tpu.pipeline_mode<synchronous>, transform_indices = @transform_5, window_bounds = array<i64: 64, 32>}, {pipeline_mode = #tpu.pipeline_mode<synchronous>, transform_indices = @transform_6, window_bounds = array<i64: 1, 32>}, {pipeline_mode = #tpu.pipeline_mode<synchronous>, transform_indices = @transform_7, window_bounds = array<i64: 32, 4>}, {pipeline_mode = #tpu.pipeline_mode<synchronous>, transform_indices = @transform_8, window_bounds = array<i64: 1, 4>}, {transform_indices = @transform_9, window_bounds = array<i64: 8, 4>}]} {
    %c0 = arith.constant 0 : index
    %c0_0 = arith.constant 0 : index
    %0 = vector.load %arg1[%c0, %c0_0] : memref<8x8xbf16, #tpu.memory_space<vmem>>, vector<8x8xbf16>
    %c0_1 = arith.constant 0 : index
    %c0_2 = arith.constant 0 : index
    %1 = vector.load %arg2[%c0_1, %c0_2] : memref<8x64xbf16, #tpu.memory_space<vmem>>, vector<8x64xbf16>
    %cst = arith.constant dense<0.000000e+00> : vector<8x64xf32>
    %2 = tpu.matmul %0, %1, %cst {dimension_numbers = #tpu.dot_dimension_numbers<[1], [0], [0], [1], [0, 0, 1, 1], [], []>} : vector<8x8xbf16>, vector<8x64xbf16>, vector<8x64xf32> -> vector<8x64xf32>
    %c0_3 = arith.constant 0 : index
    %c0_4 = arith.constant 0 : index
    %3 = vector.load %arg3[%c0_3, %c0_4] : memref<1x64xf32, #tpu.memory_space<vmem>>, vector<1x64xf32>
    %4 = vector.broadcast %3 : vector<1x64xf32> to vector<8x64xf32>
    %5 = arith.addf %2, %4 : vector<8x64xf32>
    %cst_5 = arith.constant 0.000000e+00 : f32
    %6 = vector.broadcast %cst_5 : f32 to vector<8x64xf32>
    %7 = arith.maximumf %5, %6 : vector<8x64xf32>
    %8 = arith.truncf %7 : vector<8x64xf32> to vector<8x64xbf16>
    %c0_6 = arith.constant 0 : index
    %c0_7 = arith.constant 0 : index
    %9 = vector.load %arg4[%c0_6, %c0_7] : memref<64x64xbf16, #tpu.memory_space<vmem>>, vector<64x64xbf16>
    %cst_8 = arith.constant dense<0.000000e+00> : vector<8x64xf32>
    %10 = tpu.matmul %8, %9, %cst_8 {dimension_numbers = #tpu.dot_dimension_numbers<[1], [0], [0], [1], [0, 0, 1, 1], [], []>} : vector<8x64xbf16>, vector<64x64xbf16>, vector<8x64xf32> -> vector<8x64xf32>
    %c0_9 = arith.constant 0 : index
    %c0_10 = arith.constant 0 : index
    %11 = vector.load %arg5[%c0_9, %c0_10] : memref<1x64xf32, #tpu.memory_space<vmem>>, vector<1x64xf32>
    %12 = vector.broadcast %11 : vector<1x64xf32> to vector<8x64xf32>
    %13 = arith.addf %10, %12 : vector<8x64xf32>
    %cst_11 = arith.constant 0.000000e+00 : f32
    %14 = vector.broadcast %cst_11 : f32 to vector<8x64xf32>
    %15 = arith.maximumf %13, %14 : vector<8x64xf32>
    %16 = arith.truncf %15 : vector<8x64xf32> to vector<8x64xbf16>
    %c0_12 = arith.constant 0 : index
    %c0_13 = arith.constant 0 : index
    %17 = vector.load %arg6[%c0_12, %c0_13] : memref<64x32xbf16, #tpu.memory_space<vmem>>, vector<64x32xbf16>
    %cst_14 = arith.constant dense<0.000000e+00> : vector<8x32xf32>
    %18 = tpu.matmul %16, %17, %cst_14 {dimension_numbers = #tpu.dot_dimension_numbers<[1], [0], [0], [1], [0, 0, 1, 1], [], []>} : vector<8x64xbf16>, vector<64x32xbf16>, vector<8x32xf32> -> vector<8x32xf32>
    %c0_15 = arith.constant 0 : index
    %c0_16 = arith.constant 0 : index
    %19 = vector.load %arg7[%c0_15, %c0_16] : memref<1x32xf32, #tpu.memory_space<vmem>>, vector<1x32xf32>
    %20 = vector.broadcast %19 : vector<1x32xf32> to vector<8x32xf32>
    %21 = arith.addf %18, %20 : vector<8x32xf32>
    %cst_17 = arith.constant 0.000000e+00 : f32
    %22 = vector.broadcast %cst_17 : f32 to vector<8x32xf32>
    %23 = arith.maximumf %21, %22 : vector<8x32xf32>
    %24 = arith.truncf %23 : vector<8x32xf32> to vector<8x32xbf16>
    %c0_18 = arith.constant 0 : index
    %c0_19 = arith.constant 0 : index
    %25 = vector.load %arg8[%c0_18, %c0_19] : memref<32x4xbf16, #tpu.memory_space<vmem>>, vector<32x4xbf16>
    %cst_20 = arith.constant dense<0.000000e+00> : vector<8x4xf32>
    %26 = tpu.matmul %24, %25, %cst_20 {dimension_numbers = #tpu.dot_dimension_numbers<[1], [0], [0], [1], [0, 0, 1, 1], [], []>} : vector<8x32xbf16>, vector<32x4xbf16>, vector<8x4xf32> -> vector<8x4xf32>
    %c0_21 = arith.constant 0 : index
    %c0_22 = arith.constant 0 : index
    %27 = vector.load %arg9[%c0_21, %c0_22] : memref<1x4xf32, #tpu.memory_space<vmem>>, vector<1x4xf32>
    %28 = vector.broadcast %27 : vector<1x4xf32> to vector<8x4xf32>
    %29 = arith.addf %26, %28 : vector<8x4xf32>
    %c0_23 = arith.constant 0 : index
    %c0_24 = arith.constant 0 : index
    %30 = vector.load %arg10[%c0_23, %c0_24] : memref<8x4xf32, #tpu.memory_space<vmem>>, vector<8x4xf32>
    tpu.vector_store %arg10[%c0_23, %c0_24], %29 {strides = array<i32>} : memref<8x4xf32, #tpu.memory_space<vmem>>, vector<8x4xf32>,
    return
  }
  func.func @transform_0(%arg0: i32) -> (i32, i32) {
    %c0_i32 = arith.constant 0 : i32
    %c0_i32_0 = arith.constant 0 : i32
    return %arg0, %c0_i32 : i32, i32
  }
  func.func @transform_1(%arg0: i32) -> (i32, i32) {
    %c0_i32 = arith.constant 0 : i32
    %c0_i32_0 = arith.constant 0 : i32
    %c0_i32_1 = arith.constant 0 : i32
    return %c0_i32, %c0_i32_0 : i32, i32
  }
  func.func @transform_2(%arg0: i32) -> (i32, i32) {
    %c0_i32 = arith.constant 0 : i32
    %c0_i32_0 = arith.constant 0 : i32
    %c0_i32_1 = arith.constant 0 : i32
    return %c0_i32, %c0_i32_0 : i32, i32
  }
  func.func @transform_3(%arg0: i32) -> (i32, i32) {
    %c0_i32 = arith.constant 0 : i32
    %c0_i32_0 = arith.constant 0 : i32
    %c0_i32_1 = arith.constant 0 : i32
    return %c0_i32, %c0_i32_0 : i32, i32
  }
  func.func @transform_4(%arg0: i32) -> (i32, i32) {
    %c0_i32 = arith.constant 0 : i32
    %c0_i32_0 = arith.constant 0 : i32
    %c0_i32_1 = arith.constant 0 : i32
    return %c0_i32, %c0_i32_0 : i32, i32
  }
  func.func @transform_5(%arg0: i32) -> (i32, i32) {
    %c0_i32 = arith.constant 0 : i32
    %c0_i32_0 = arith.constant 0 : i32
    %c0_i32_1 = arith.constant 0 : i32
    return %c0_i32, %c0_i32_0 : i32, i32
  }
  func.func @transform_6(%arg0: i32) -> (i32, i32) {
    %c0_i32 = arith.constant 0 : i32
    %c0_i32_0 = arith.constant 0 : i32
    %c0_i32_1 = arith.constant 0 : i32
    return %c0_i32, %c0_i32_0 : i32, i32
  }
  func.func @transform_7(%arg0: i32) -> (i32, i32) {
    %c0_i32 = arith.constant 0 : i32
    %c0_i32_0 = arith.constant 0 : i32
    %c0_i32_1 = arith.constant 0 : i32
    return %c0_i32, %c0_i32_0 : i32, i32
  }
  func.func @transform_8(%arg0: i32) -> (i32, i32) {
    %c0_i32 = arith.constant 0 : i32
    %c0_i32_0 = arith.constant 0 : i32
    %c0_i32_1 = arith.constant 0 : i32
    return %c0_i32, %c0_i32_0 : i32, i32
  }
  func.func @transform_9(%arg0: i32) -> (i32, i32) {
    %c0_i32 = arith.constant 0 : i32
    %c0_i32_0 = arith.constant 0 : i32
    return %arg0, %c0_i32 : i32, i32
  }
}

</mosaic_0001>

<llo_original>
// kernel: qnetwork_forward.1
$region0: #{qnetwork_forward.1}
  #allocation0 [shape = 'u32[]', space=smem, size = 0x4, offset = 0x4, fixed_abs, tag = 'smem constant byte address 0x4 - core index']
  #allocation1 [shape = 'u32[144,128]{1,0:T(1,128)}', space=vmem, size = 0x12000, scoped, tag = 'internal scratch']
  %s0 = inlined_call_operand.vmem [shape: bf16[8,8], index: 0, kind: input, shape index: {}]
  %s1 = inlined_call_operand.vmem [shape: bf16[8,64], index: 1, kind: input, shape index: {}]
  %s2 = inlined_call_operand.vmem [shape: f32[1,64], index: 2, kind: input, shape index: {}]
  %s3 = inlined_call_operand.vmem [shape: bf16[64,64], index: 3, kind: input, shape index: {}]
  %s4 = inlined_call_operand.vmem [shape: f32[1,64], index: 4, kind: input, shape index: {}]
  %s5 = inlined_call_operand.vmem [shape: bf16[64,32], index: 5, kind: input, shape index: {}]
  %s6 = inlined_call_operand.vmem [shape: f32[1,32], index: 6, kind: input, shape index: {}]
  %s7 = inlined_call_operand.vmem [shape: bf16[32,4], index: 7, kind: input, shape index: {}]
  %s8 = inlined_call_operand.vmem [shape: f32[1,4], index: 8, kind: input, shape index: {}]
  %s9 = inlined_call_operand.vmem [shape: f32[8,4], index: 9, kind: output, shape index: {}]
  %s10 = sld [smem:[#allocation0]]
  $region46: #{qnetwork_forward.1} parent=0
    _
  %s12 = ssub.s32 1, %s10
  %s13 = scalar_select 0, %s12, %s10
  // Predicated region
  $region2: #{qnetwork_forward.1} parent=0 // pred_check
    _
  $region3: #{qnetwork_forward.1} parent=0 // pred_check_branch
    %15 = sbr.rel (0) target = $region5
  $region4: #{qnetwork_forward.1} parent=0 // pred_region
    _
  $region5: #{qnetwork_forward.1} parent=0 // pred_fallthru
    _
  // Predicated region
  $region6: #{qnetwork_forward.1} parent=0 // pred_check
    _
  $region7: #{qnetwork_forward.1} parent=0 // pred_check_branch
    %17 = sbr.rel (0) target = $region9
  $region8: #{qnetwork_forward.1} parent=0 // pred_region
    _
  $region9: #{qnetwork_forward.1} parent=0 // pred_fallthru
    _
  // Predicated region
  $region10: #{qnetwork_forward.1} parent=0 // pred_check
    _
  $region11: #{qnetwork_forward.1} parent=0 // pred_check_branch
    %19 = sbr.rel (0) target = $region13
  $region12: #{qnetwork_forward.1} parent=0 // pred_region
    _
  $region13: #{qnetwork_forward.1} parent=0 // pred_fallthru
    _
  // Predicated region
  $region14: #{qnetwork_forward.1} parent=0 // pred_check
    _
  $region15: #{qnetwork_forward.1} parent=0 // pred_check_branch
    %21 = sbr.rel (0) target = $region17
  $region16: #{qnetwork_forward.1} parent=0 // pred_region
    _
  $region17: #{qnetwork_forward.1} parent=0 // pred_fallthru
    _
  // Predicated region
  $region18: #{qnetwork_forward.1} parent=0 // pred_check
    _
  $region19: #{qnetwork_forward.1} parent=0 // pred_check_branch
    %23 = sbr.rel (0) target = $region21
  $region20: #{qnetwork_forward.1} parent=0 // pred_region
    _
  $region21: #{qnetwork_forward.1} parent=0 // pred_fallthru
    _
  // Predicated region
  $region22: #{qnetwork_forward.1} parent=0 // pred_check
    _
  $region23: #{qnetwork_forward.1} parent=0 // pred_check_branch
    %25 = sbr.rel (0) target = $region25
  $region24: #{qnetwork_forward.1} parent=0 // pred_region
    _
  $region25: #{qnetwork_forward.1} parent=0 // pred_fallthru
    _
  // Predicated region
  $region26: #{qnetwork_forward.1} parent=0 // pred_check
    _
  $region27: #{qnetwork_forward.1} parent=0 // pred_check_branch
    %27 = sbr.rel (0) target = $region29
  $region28: #{qnetwork_forward.1} parent=0 // pred_region
    _
  $region29: #{qnetwork_forward.1} parent=0 // pred_fallthru
    _
  // Predicated region
  $region30: #{qnetwork_forward.1} parent=0 // pred_check
    _
  $region31: #{qnetwork_forward.1} parent=0 // pred_check_branch
    %29 = sbr.rel (0) target = $region33
  $region32: #{qnetwork_forward.1} parent=0 // pred_region
    _
  $region33: #{qnetwork_forward.1} parent=0 // pred_fallthru
    _
  // Predicated region
  $region34: #{qnetwork_forward.1} parent=0 // pred_check
    _
  $region35: #{qnetwork_forward.1} parent=0 // pred_check_branch
    %31 = sbr.rel (0) target = $region37
  $region36: #{qnetwork_forward.1} parent=0 // pred_region
    _
  $region37: #{qnetwork_forward.1} parent=0 // pred_fallthru
    _
  %v33 = vld [vmem:[%s0] sm:$0xf]
  %v34 = vld [vmem:[%s1] sm:$0xf]
  %v35 = vld [vmem:[%s2] sm:$0x1]
  %v37 = vlaneseq
  %v38 = vshrl.u32 %v37, 7
  %v39 = vsub.s32 0, %v38
  %v40 = vrot.slane %v35, %v39
  %vm42 = vcmask 64512
  %v44 = vsel %vm42, %v33, 0
  %vm46 = vcmask 1043456
  %v48 = vsel %vm46, %v34, 0
  %50 = vmatprep.subr.bf16.mxu0 0
  %51 = vmatpush1.bf16.msra.mxu0 %v48
  %52 = vmatprep.subr.bf16.mxu0 0
  %53 = vmatpush1.bf16.msra.mxu0 0
  %54 = vmatprep.subr.bf16.mxu0 0
  %55 = vmatpush1.bf16.msra.mxu0 0
  %56 = vmatprep.subr.bf16.mxu0 0
  %57 = vmatpush1.bf16.msra.mxu0 0
  %58 = vmatprep.subr.bf16.mxu0 0
  %59 = vmatpush1.bf16.msra.mxu0 0
  %60 = vmatprep.subr.bf16.mxu0 0
  %61 = vmatpush1.bf16.msra.mxu0 0
  %62 = vmatprep.subr.bf16.mxu0 0
  %63 = vmatpush1.bf16.msra.mxu0 0
  %64 = vmatprep.subr.bf16.mxu0 0
  %65 = vmatpush1.bf16.msra.mxu0 0
  %66 = vmatprep.subr.bf16.mxu0 0
  %67 = vmatpush1.bf16.msra.mxu0 0
  %68 = vmatprep.subr.bf16.mxu0 0
  %69 = vmatpush1.bf16.msra.mxu0 0
  %70 = vmatprep.subr.bf16.mxu0 0
  %71 = vmatpush1.bf16.msra.mxu0 0
  %72 = vmatprep.subr.bf16.mxu0 0
  %73 = vmatpush1.bf16.msra.mxu0 0
  %74 = vmatprep.subr.bf16.mxu0 0
  %75 = vmatpush1.bf16.msra.mxu0 0
  %76 = vmatprep.subr.bf16.mxu0 0
  %77 = vmatpush1.bf16.msra.mxu0 0
  %78 = vmatprep.subr.bf16.mxu0 0
  %79 = vmatpush1.bf16.msra.mxu0 0
  %80 = vmatprep.subr.bf16.mxu0 0
  %81 = vmatpush1.bf16.msra.mxu0 0
  %82 = vmatprep.mubr.bf16.mxu0 0
  %83 = vmatmul.mubr.bf16.gmra.mrb[0].mxu0 %v44
  %v84 = vpop.f32.mrb[0].mxu0
  %v85 = vadd.f32 %v40, %v84
  %v86 = vpop.f32.mrb[0].mxu0
  %v87 = vpop.f32.mrb[0].mxu0
  %v88 = vpop.f32.mrb[0].mxu0
  %89 = vdwg.mxu0
  %v90 = vmax.f32 %v85, 0.0
  %v91 = vpack.c.bf16 %v90, %v90
  %v92 = vld [vmem:[%s3] sm:$0xf]
  %v93 = vld [vmem:[%s3 + $0x4] sm:$0xf]
  %v94 = vld [vmem:[%s3 + $0x8] sm:$0xf]
  %v95 = vld [vmem:[%s3 + $0xc] sm:$0xf]
  %v96 = vld [vmem:[%s3 + $0x10] sm:$0xf]
  %v97 = vld [vmem:[%s3 + $0x14] sm:$0xf]
  %v98 = vld [vmem:[%s3 + $0x18] sm:$0xf]
  %v99 = vld [vmem:[%s3 + $0x1c] sm:$0xf]
  %v100 = vld [vmem:[%s4] sm:$0x1]
  %v102 = vlaneseq
  %v103 = vshrl.u32 %v102, 7
  %v104 = vsub.s32 0, %v103
  %v105 = vrot.slane %v100, %v104
  %v115 = vunpack.c.l.b16 %v92
  %v116 = vunpack.c.l.b16 %v93
  %v117 = vunpack.c.l.b16 %v94
  %v118 = vunpack.c.l.b16 %v95
  %v119 = vunpack.c.l.b16 %v96
  %v120 = vunpack.c.l.b16 %v97
  %v121 = vunpack.c.l.b16 %v98
  %v122 = vunpack.c.l.b16 %v99
  %v123 = vpack.c.b16 %v116, %v115
  %v124 = vpack.c.b16 %v118, %v117
  %v125 = vpack.c.b16 %v120, %v119
  %v126 = vpack.c.b16 %v122, %v121
  %vm131 = vcmask 523264
  %v133 = vsel %vm131, %v91, 0
  %135 = vmatprep.subr.bf16.mxu0 0
  %136 = vmatpush1.bf16.msra.mxu0 %v123
  %137 = vmatprep.subr.bf16.mxu0 0
  %138 = vmatpush1.bf16.msra.mxu0 %v124
  %139 = vmatprep.subr.bf16.mxu0 0
  %140 = vmatpush1.bf16.msra.mxu0 %v125
  %141 = vmatprep.subr.bf16.mxu0 0
  %142 = vmatpush1.bf16.msra.mxu0 %v126
  %143 = vmatprep.subr.bf16.mxu0 0
  %144 = vmatpush1.bf16.msra.mxu0 0
  %145 = vmatprep.subr.bf16.mxu0 0
  %146 = vmatpush1.bf16.msra.mxu0 0
  %147 = vmatprep.subr.bf16.mxu0 0
  %148 = vmatpush1.bf16.msra.mxu0 0
  %149 = vmatprep.subr.bf16.mxu0 0
  %150 = vmatpush1.bf16.msra.mxu0 0
  %151 = vmatprep.subr.bf16.mxu0 0
  %152 = vmatpush1.bf16.msra.mxu0 0
  %153 = vmatprep.subr.bf16.mxu0 0
  %154 = vmatpush1.bf16.msra.mxu0 0
  %155 = vmatprep.subr.bf16.mxu0 0
  %156 = vmatpush1.bf16.msra.mxu0 0
  %157 = vmatprep.subr.bf16.mxu0 0
  %158 = vmatpush1.bf16.msra.mxu0 0
  %159 = vmatprep.subr.bf16.mxu0 0
  %160 = vmatpush1.bf16.msra.mxu0 0
  %161 = vmatprep.subr.bf16.mxu0 0
  %162 = vmatpush1.bf16.msra.mxu0 0
  %163 = vmatprep.subr.bf16.mxu0 0
  %164 = vmatpush1.bf16.msra.mxu0 0
  %165 = vmatprep.subr.bf16.mxu0 0
  %166 = vmatpush1.bf16.msra.mxu0 0
  %167 = vmatprep.mubr.bf16.mxu0 0
  %168 = vmatmul.mubr.bf16.gmra.mrb[0].mxu0 %v133
  %v169 = vpop.f32.mrb[0].mxu0
  %v170 = vadd.f32 %v105, %v169
  %v171 = vpop.f32.mrb[0].mxu0
  %v172 = vpop.f32.mrb[0].mxu0
  %v173 = vpop.f32.mrb[0].mxu0
  %174 = vdwg.mxu0
  %v175 = vmax.f32 %v170, 0.0
  %v176 = vpack.c.bf16 %v175, %v175
  %v177 = vld [vmem:[%s5] sm:$0xf]
  %v178 = vld [vmem:[%s5 + $0x4] sm:$0xf]
  %v179 = vld [vmem:[%s5 + $0x8] sm:$0xf]
  %v180 = vld [vmem:[%s5 + $0xc] sm:$0xf]
  %v181 = vld [vmem:[%s5 + $0x10] sm:$0xf]
  %v182 = vld [vmem:[%s5 + $0x14] sm:$0xf]
  %v183 = vld [vmem:[%s5 + $0x18] sm:$0xf]
  %v184 = vld [vmem:[%s5 + $0x1c] sm:$0xf]
  %v185 = vld [vmem:[%s6] sm:$0x1]
  %v187 = vlaneseq
  %v188 = vshrl.u32 %v187, 7
  %v189 = vsub.s32 0, %v188
  %v190 = vrot.slane %v185, %v189
  %v200 = vunpack.c.l.b16 %v177
  %v201 = vunpack.c.l.b16 %v178
  %v202 = vunpack.c.l.b16 %v179
  %v203 = vunpack.c.l.b16 %v180
  %v204 = vunpack.c.l.b16 %v181
  %v205 = vunpack.c.l.b16 %v182
  %v206 = vunpack.c.l.b16 %v183
  %v207 = vunpack.c.l.b16 %v184
  %v208 = vpack.c.b16 %v201, %v200
  %v209 = vpack.c.b16 %v203, %v202
  %v210 = vpack.c.b16 %v205, %v204
  %v211 = vpack.c.b16 %v207, %v206
  %v217 = vsel %vm131, %v176, 0
  %219 = vmatprep.subr.bf16.mxu0 0
  %220 = vmatpush1.bf16.msra.mxu0 %v208
  %221 = vmatprep.subr.bf16.mxu0 0
  %222 = vmatpush1.bf16.msra.mxu0 %v209
  %223 = vmatprep.subr.bf16.mxu0 0
  %224 = vmatpush1.bf16.msra.mxu0 %v210
  %225 = vmatprep.subr.bf16.mxu0 0
  %226 = vmatpush1.bf16.msra.mxu0 %v211
  %227 = vmatprep.subr.bf16.mxu0 0
  %228 = vmatpush1.bf16.msra.mxu0 0
  %229 = vmatprep.subr.bf16.mxu0 0
  %230 = vmatpush1.bf16.msra.mxu0 0
  %231 = vmatprep.subr.bf16.mxu0 0
  %232 = vmatpush1.bf16.msra.mxu0 0
  %233 = vmatprep.subr.bf16.mxu0 0
  %234 = vmatpush1.bf16.msra.mxu0 0
  %235 = vmatprep.subr.bf16.mxu0 0
  %236 = vmatpush1.bf16.msra.mxu0 0
  %237 = vmatprep.subr.bf16.mxu0 0
  %238 = vmatpush1.bf16.msra.mxu0 0
  %239 = vmatprep.subr.bf16.mxu0 0
  %240 = vmatpush1.bf16.msra.mxu0 0
  %241 = vmatprep.subr.bf16.mxu0 0
  %242 = vmatpush1.bf16.msra.mxu0 0
  %243 = vmatprep.subr.bf16.mxu0 0
  %244 = vmatpush1.bf16.msra.mxu0 0
  %245 = vmatprep.subr.bf16.mxu0 0
  %246 = vmatpush1.bf16.msra.mxu0 0
  %247 = vmatprep.subr.bf16.mxu0 0
  %248 = vmatpush1.bf16.msra.mxu0 0
  %249 = vmatprep.subr.bf16.mxu0 0
  %250 = vmatpush1.bf16.msra.mxu0 0
  %251 = vmatprep.mubr.bf16.mxu0 0
  %252 = vmatmul.mubr.bf16.gmra.mrb[0].mxu0 %v217
  %v253 = vpop.f32.mrb[0].mxu0
  %v254 = vadd.f32 %v190, %v253
  %v255 = vpop.f32.mrb[0].mxu0
  %v256 = vpop.f32.mrb[0].mxu0
  %v257 = vpop.f32.mrb[0].mxu0
  %258 = vdwg.mxu0
  %v259 = vmax.f32 %v254, 0.0
  %v260 = vpack.c.bf16 %v259, %v259
  %v261 = vld [vmem:[%s7] sm:$0xf]
  %v262 = vld [vmem:[%s7 + $0x4] sm:$0xf]
  %v263 = vld [vmem:[%s7 + $0x8] sm:$0xf]
  %v264 = vld [vmem:[%s7 + $0xc] sm:$0xf]
  %v265 = vld [vmem:[%s8] sm:$0x1]
  %v267 = vlaneseq
  %v268 = vshrl.u32 %v267, 7
  %v269 = vsub.s32 0, %v268
  %v270 = vrot.slane %v265, %v269
  %v276 = vunpack.c.l.b16 %v261
  %v277 = vunpack.c.l.b16 %v262
  %v278 = vunpack.c.l.b16 %v263
  %v279 = vunpack.c.l.b16 %v264
  %v280 = vpack.c.b16 %v277, %v276
  %v281 = vpack.c.b16 %v279, %v278
  %vm284 = vcmask 261120
  %v286 = vsel %vm284, %v260, 0
  %288 = vmatprep.subr.bf16.mxu0 0
  %289 = vmatpush1.bf16.msra.mxu0 %v280
  %290 = vmatprep.subr.bf16.mxu0 0
  %291 = vmatpush1.bf16.msra.mxu0 %v281
  %292 = vmatprep.subr.bf16.mxu0 0
  %293 = vmatpush1.bf16.msra.mxu0 0
  %294 = vmatprep.subr.bf16.mxu0 0
  %295 = vmatpush1.bf16.msra.mxu0 0
  %296 = vmatprep.subr.bf16.mxu0 0
  %297 = vmatpush1.bf16.msra.mxu0 0
  %298 = vmatprep.subr.bf16.mxu0 0
  %299 = vmatpush1.bf16.msra.mxu0 0
  %300 = vmatprep.subr.bf16.mxu0 0
  %301 = vmatpush1.bf16.msra.mxu0 0
  %302 = vmatprep.subr.bf16.mxu0 0
  %303 = vmatpush1.bf16.msra.mxu0 0
  %304 = vmatprep.subr.bf16.mxu0 0
  %305 = vmatpush1.bf16.msra.mxu0 0
  %306 = vmatprep.subr.bf16.mxu0 0
  %307 = vmatpush1.bf16.msra.mxu0 0
  %308 = vmatprep.subr.bf16.mxu0 0
  %309 = vmatpush1.bf16.msra.mxu0 0
  %310 = vmatprep.subr.bf16.mxu0 0
  %311 = vmatpush1.bf16.msra.mxu0 0
  %312 = vmatprep.subr.bf16.mxu0 0
  %313 = vmatpush1.bf16.msra.mxu0 0
  %314 = vmatprep.subr.bf16.mxu0 0
  %315 = vmatpush1.bf16.msra.mxu0 0
  %316 = vmatprep.subr.bf16.mxu0 0
  %317 = vmatpush1.bf16.msra.mxu0 0
  %318 = vmatprep.subr.bf16.mxu0 0
  %319 = vmatpush1.bf16.msra.mxu0 0
  %320 = vmatprep.mubr.bf16.mxu0 0
  %321 = vmatmul.mubr.bf16.gmra.mrb[0].mxu0 %v286
  %v322 = vpop.f32.mrb[0].mxu0
  %v323 = vadd.f32 %v270, %v322
  %v324 = vpop.f32.mrb[0].mxu0
  %v325 = vpop.f32.mrb[0].mxu0
  %v326 = vpop.f32.mrb[0].mxu0
  %327 = vdwg.mxu0
  %vm328 = vcmask 31744
  %329 = vst.msk [vmem:[%s9] sm:$0xff] %vm328, %v323
  // Predicated region
  $region38: #{qnetwork_forward.1} parent=0 // pred_check
    _
  $region39: #{qnetwork_forward.1} parent=0 // pred_check_branch
    %331 = sbr.rel (0) target = $region41
  $region40: #{qnetwork_forward.1} parent=0 // pred_region
    _
  $region41: #{qnetwork_forward.1} parent=0 // pred_fallthru
    _
  // Predicated region
  $region42: #{qnetwork_forward.1} parent=0 // pred_check
    _
  $region43: #{qnetwork_forward.1} parent=0 // pred_check_branch
    %333 = sbr.rel (0) target = $region45
  $region44: #{qnetwork_forward.1} parent=0 // pred_region
    _
  $region45: #{qnetwork_forward.1} parent=0 // pred_fallthru
    _

</llo_original>
